<compile_context>
chip_gen: v5e
topology: v5e:2x2
jax: 0.10.0
libtpu: 0.0.40
codegen_flags: <defaults>
</compile_context>

<pallas_src>
import jax
import jax.numpy as jnp
from jax.experimental import pallas as pl
from jax.experimental.pallas import tpu as pltpu


def _upconv_matmul_kernel(w_ref, p_ref, o_ref):
    """Single packed MXU matmul + fused LeakyReLU(0.2).

    w_ref: (4*Cout, 9*Cin)  folded phase weights (LHS, resident)
    p_ref: (9*Cin, TM)      im2col patches, spatial in lanes (RHS block)
    o_ref: (4*Cout, TM)     phase-major, channels-first output block
    """
    acc = jnp.dot(w_ref[...], p_ref[...], preferred_element_type=jnp.float32)
    acc = jnp.maximum(acc, 0.2 * acc)          # LeakyReLU(0.2), one VPU select
    o_ref[...] = acc.astype(o_ref.dtype)


def upconv_forward(x_nchw, w_oihw):
    """x_nchw: (N, Cin, H, W) f32; w_oihw: (Cout, Cin, 4, 4) f32 (PyTorch layout)."""
    N, Cin, H, W = x_nchw.shape
    Cout, Cin_w, K, K2 = w_oihw.shape
    assert Cin_w == Cin and K == 4 and K2 == 4
    dtype = x_nchw.dtype

    # ---- fold upsample + F.pad(0,1,0,1) + conv pad=1 into 3x3 phase weights ----
    # Output row 2i+a reads source rows i-1, i, i+1; original taps kh group as
    # derived from floor((a + kh - 1) / 2):
    agg = jnp.array(
        [[[1, 0, 0, 0],            # a == 0: di=-1 <- kh=0
          [0, 1, 1, 0],            #         di= 0 <- kh=1,2
          [0, 0, 0, 1]],           #         di=+1 <- kh=3
         [[0, 0, 0, 0],            # a == 1: di=-1 <- (none)
          [1, 1, 0, 0],            #         di= 0 <- kh=0,1
          [0, 0, 1, 1]]],          #         di=+1 <- kh=2,3
        dtype=dtype)                                   # (2, 3, K)

    # w_eff[a,b,o,d,e,c] = sum_{kh,kw} agg[a,d,kh] * agg[b,e,kw] * w[o,c,kh,kw]
    w_eff = jnp.einsum("adk,bel,ockl->abodec", agg, agg, w_oihw)
    lhs = w_eff.reshape(4 * Cout, 9 * Cin)             # rows=(a,b,co), cols=(d,e,ci)

    # ---- im2col at ORIGINAL resolution, lane-dense (spatial in lanes) ----
    x_pad = jnp.pad(x_nchw, ((0, 0), (0, 0), (1, 1), (1, 1)))
    slabs = [x_pad[:, :, d:d + H, e:e + W]             # (N, Cin, H, W) per tap
             for d in range(3) for e in range(3)]
    rhs = jnp.stack(slabs, axis=1)                     # (N, 9, Cin, H, W)
    M = N * H * W
    Kc = 9 * Cin
    rhs = rhs.reshape(N, Kc, H * W).transpose(1, 0, 2).reshape(Kc, M)

    # ---- tile the lane (M) dim: pipeline depth + feeds both v7x TensorCores ----
    if M % 256 == 0:
        tm = 256
    elif M % 128 == 0:
        tm = 128
    else:
        tm = M                                          # full-dim block (allowed)
    grid = (M // tm,)

    out_flat = pl.pallas_call(
        _upconv_matmul_kernel,
        out_shape=jax.ShapeDtypeStruct((4 * Cout, M), dtype),
        grid_spec=pltpu.PrefetchScalarGridSpec(
            num_scalar_prefetch=0,
            grid=grid,
            in_specs=[
                pl.BlockSpec((4 * Cout, Kc), lambda m: (0, 0)),
                pl.BlockSpec((Kc, tm), lambda m: (0, m)),
            ],
            out_specs=pl.BlockSpec((4 * Cout, tm), lambda m: (0, m)),
        ),
        compiler_params=pltpu.CompilerParams(
            dimension_semantics=("parallel",)),
    )(lhs, rhs)

    # ---- de-interleave the 4 phases back to NCHW (N, Cout, 2H, 2W) ----
    y = out_flat.reshape(2, 2, Cout, N, H, W)           # (a, b, co, n, i, j)
    y = y.transpose(3, 2, 4, 0, 5, 1)                   # (n, co, i, a, j, b)
    return y.reshape(N, Cout, 2 * H, 2 * W)


def upconv_reference(x_nchw, w_oihw):
    """Pure-JAX reference mirroring the PyTorch forward exactly (NCHW/OIHW)."""
    x = jnp.repeat(jnp.repeat(x_nchw, 2, axis=2), 2, axis=3)   # nearest x2
    x = jnp.pad(x, ((0, 0), (0, 0), (0, 1), (0, 1)))           # F.pad(0,1,0,1)
    y = jax.lax.conv_general_dilated(
        x, w_oihw, window_strides=(1, 1), padding=((1, 1), (1, 1)),
        dimension_numbers=("NCHW", "OIHW", "NCHW"))
    return jnp.where(y >= 0.0, y, 0.2 * y)                      # LeakyReLU(0.2)


if __name__ == "__main__":
    key = jax.random.PRNGKey(0)
    kx, kw = jax.random.split(key)

    # Small shapes consistent with the module: UpConv(in=4, out=8, kernel=4).
    N, Cin, H, W = 2, 4, 16, 16
    Cout, K = 8, 4

    x = jax.random.normal(kx, (N, Cin, H, W), dtype=jnp.float32)
    w = 0.1 * jax.random.normal(kw, (Cout, Cin, K, K), dtype=jnp.float32)

    y = jax.block_until_ready(jax.jit(upconv_forward)(x, w))
    y_ref = upconv_reference(x, w)

    assert y.shape == (N, Cout, 2 * H, 2 * W), y.shape
    assert jnp.allclose(y, y_ref, atol=1e-3, rtol=1e-3), \
        float(jnp.max(jnp.abs(y - y_ref)))
    print("KERNEL_OK")
</pallas_src>

<mosaic_0001>
module attributes {stable_mosaic.version = 11 : i64} {
  func.func @_upconv_matmul_kernel(%arg0: i32, %arg1: memref<32x36xf32, #tpu.memory_space<vmem>>, %arg2: memref<36x256xf32, #tpu.memory_space<vmem>>, %arg3: memref<32x256xf32, #tpu.memory_space<vmem>>) attributes {dimension_semantics = [#tpu.dimension_semantics<parallel>], iteration_bounds = array<i64: 2>, scalar_prefetch = 0 : i64, scratch_operands = 0 : i64, tpu.core_type = #tpu.core_type<tc>, window_params = [{pipeline_mode = #tpu.pipeline_mode<synchronous>, transform_indices = @transform_0, window_bounds = array<i64: 32, 36>}, {transform_indices = @transform_1, window_bounds = array<i64: 36, 256>}, {transform_indices = @transform_2, window_bounds = array<i64: 32, 256>}]} {
    %c0 = arith.constant 0 : index
    %c0_0 = arith.constant 0 : index
    %0 = vector.load %arg1[%c0, %c0_0] : memref<32x36xf32, #tpu.memory_space<vmem>>, vector<32x36xf32>
    %c0_1 = arith.constant 0 : index
    %c0_2 = arith.constant 0 : index
    %1 = vector.load %arg2[%c0_1, %c0_2] : memref<36x256xf32, #tpu.memory_space<vmem>>, vector<36x256xf32>
    %cst = arith.constant dense<0.000000e+00> : vector<32x256xf32>
    %2 = tpu.matmul %0, %1, %cst {dimension_numbers = #tpu.dot_dimension_numbers<[1], [0], [0], [1], [0, 0, 1, 1], [], []>} : vector<32x36xf32>, vector<36x256xf32>, vector<32x256xf32> -> vector<32x256xf32>
    %cst_3 = arith.constant 2.000000e-01 : f32
    %3 = vector.broadcast %cst_3 : f32 to vector<32x256xf32>
    %4 = arith.mulf %3, %2 : vector<32x256xf32>
    %5 = arith.maximumf %2, %4 : vector<32x256xf32>
    %c0_4 = arith.constant 0 : index
    %c0_5 = arith.constant 0 : index
    %6 = vector.load %arg3[%c0_4, %c0_5] : memref<32x256xf32, #tpu.memory_space<vmem>>, vector<32x256xf32>
    tpu.vector_store %arg3[%c0_4, %c0_5], %5 {strides = array<i32>} : memref<32x256xf32, #tpu.memory_space<vmem>>, vector<32x256xf32>,
    return
  }
  func.func @transform_0(%arg0: i32) -> (i32, i32) {
    %c0_i32 = arith.constant 0 : i32
    %c0_i32_0 = arith.constant 0 : i32
    %c0_i32_1 = arith.constant 0 : i32
    return %c0_i32, %c0_i32_0 : i32, i32
  }
  func.func @transform_1(%arg0: i32) -> (i32, i32) {
    %c0_i32 = arith.constant 0 : i32
    %c0_i32_0 = arith.constant 0 : i32
    return %c0_i32, %arg0 : i32, i32
  }
  func.func @transform_2(%arg0: i32) -> (i32, i32) {
    %c0_i32 = arith.constant 0 : i32
    %c0_i32_0 = arith.constant 0 : i32
    return %c0_i32, %arg0 : i32, i32
  }
}

</mosaic_0001>

<llo_original>
// kernel: upconv_forward.1
$region0: #{upconv_forward.1}
  #allocation0 [shape = 'u32[]', space=smem, size = 0x4, offset = 0x4, fixed_abs, tag = 'smem constant byte address 0x4 - core index']
  #allocation1 [shape = 'u32[72,128]{1,0:T(1,128)}', space=vmem, size = 0x9000, scoped, tag = 'internal scratch']
  %s0 = inlined_call_operand.vmem [shape: f32[32,36], index: 0, kind: input, shape index: {}]
  %s1 = inlined_call_operand.vmem [shape: f32[36,512], index: 1, kind: input, shape index: {}]
  %s2 = inlined_call_operand.vmem [shape: f32[32,512], index: 2, kind: output, shape index: {}]
  %s3 = sld [smem:[#allocation0]]
  $region83: #{upconv_forward.1} parent=0
    _
  %s5 = ssub.s32 1, %s3
  %s6 = scalar_select 0, %s5, %s3
  $region1: #{upconv_forward.1} parent=0
    #allocation2 [shape = 'u8[81920]{0}', space=vmem, size = 0x14000, scoped, tag = 'input window, operand 1']
    #allocation3 [shape = 'u8[65536]{0}', space=vmem, size = 0x10000, scoped, tag = 'output window, operand 0']
    loop: start=0, step=1, limit=4
    $region2: #{upconv_forward.1} parent=1 // loop_pre_header
      _
    $region3: #{upconv_forward.1} parent=1 // loop_header
      %s8 = sphi 0, %s12
      %p9 = scmp.ge.s32.totalorder %s8, 4
      %s16 = sphi 0, %s16
      %s18 = sphi 0, %s16
      %s19 = sphi 0, %s18
      %s33 = sphi 0, %s19
      %s39 = sphi 0, %s41
      %s42 = sphi 0, %s39
      %s43 = sphi 0, %s42
      %s59 = sphi 0, %s43
      %s65 = sphi 0, %s67
      %s68 = sphi 0, %s65
      %s69 = sphi 0, %s68
      %s85 = sphi 0, %s69
    $region4: #{upconv_forward.1} parent=1 // loop_header_branch
      %11 = sbr.rel (%p9) target = $region8
    $region5: #{upconv_forward.1} parent=1 // loop_body
      %s13 = ssub.s32 %s8, 1
      %s14 = ssub.s32 %s8, 2
      %s15 = sadd.s32 %s8, 1
      %s17 = sadd.s32 %s16, 1
      %p20 = scmp.eq.s32.totalorder %s8, 1
      %p21 = scmp.ne.s32.totalorder %s16, %s18
      %p22 = scmp.eq.s32.totalorder %s8, 0
      %p23 = por %p21, %p22
      %p24 = scmp.ne.s32.totalorder %s16, %s18
      %p25 = scmp.eq.s32.totalorder %s13, 1
      %p26 = por %p24, %p25
      %p27 = scmp.ne.s32.totalorder %s18, %s19
      %p28 = scmp.eq.s32.totalorder %s13, 0
      %p29 = por %p27, %p28
      %p30 = scmp.ne.s32.totalorder %s18, %s19
      %p31 = scmp.eq.s32.totalorder %s14, 1
      %p32 = por %p30, %p31
      %p34 = scmp.ne.s32.totalorder %s19, %s33
      %p35 = scmp.eq.s32.totalorder %s14, 0
      %p36 = por %p34, %p35
      %s37 = ssub.s32 %s8, %s15
      %p38 = scmp.eq.s32.totalorder %s37, 0
      %s40 = sadd.s32 %s39, 1
      %s41 = scalar_select %p38, %s39, %s40
      %p44 = pneg %p38
      %p45 = scmp.eq.s32.totalorder %s8, 1
      %p46 = por %p44, %p45
      %p47 = scmp.ne.s32.totalorder %s39, %s42
      %p48 = scmp.eq.s32.totalorder %s8, 0
      %p49 = por %p47, %p48
      %p50 = scmp.ne.s32.totalorder %s39, %s42
      %p51 = scmp.eq.s32.totalorder %s13, 1
      %p52 = por %p50, %p51
      %p53 = scmp.ne.s32.totalorder %s42, %s43
      %p54 = scmp.eq.s32.totalorder %s13, 0
      %p55 = por %p53, %p54
      %p56 = scmp.ne.s32.totalorder %s42, %s43
      %p57 = scmp.eq.s32.totalorder %s14, 1
      %p58 = por %p56, %p57
      %p60 = scmp.ne.s32.totalorder %s43, %s59
      %p61 = scmp.eq.s32.totalorder %s14, 0
      %p62 = por %p60, %p61
      %s63 = ssub.s32 %s8, %s15
      %p64 = scmp.eq.s32.totalorder %s63, 0
      %s66 = sadd.s32 %s65, 1
      %s67 = scalar_select %p64, %s65, %s66
      %p70 = pneg %p64
      %p71 = scmp.eq.s32.totalorder %s8, 1
      %p72 = por %p70, %p71
      %p73 = scmp.ne.s32.totalorder %s65, %s68
      %p74 = scmp.eq.s32.totalorder %s8, 0
      %p75 = por %p73, %p74
      %p76 = scmp.ne.s32.totalorder %s65, %s68
      %p77 = scmp.eq.s32.totalorder %s13, 1
      %p78 = por %p76, %p77
      %p79 = scmp.ne.s32.totalorder %s68, %s69
      %p80 = scmp.eq.s32.totalorder %s13, 0
      %p81 = por %p79, %p80
      %p82 = scmp.ne.s32.totalorder %s68, %s69
      %p83 = scmp.eq.s32.totalorder %s14, 1
      %p84 = por %p82, %p83
      %p86 = scmp.ne.s32.totalorder %s69, %s85
      %p87 = scmp.eq.s32.totalorder %s14, 0
      %p88 = por %p86, %p87
      %p89 = scmp.le.s32.totalorder 1, %s8
      %p90 = scmp.lt.s32.totalorder %s8, 3
      %p91 = pnand %p89, %p90
      %p92 = pneg %p91
      // Predicated region
      $region9: #{upconv_forward.1} parent=5 // pred_check
        _
      $region10: #{upconv_forward.1} parent=5 // pred_check_branch
        %94 = sbr.rel (%p91) target = $region12
      $region11: #{upconv_forward.1} parent=5 // pred_region
        %s95 = ssub.s32 %s8, 1
        // Predicated region
        $region13: #{upconv_forward.1} parent=11 // pred_check
          %p96 = pneg %p29
        $region14: #{upconv_forward.1} parent=11 // pred_check_branch
          %98 = sbr.rel (%p96) target = $region16
        $region15: #{upconv_forward.1} parent=11 // pred_region
          _
        $region16: #{upconv_forward.1} parent=11 // pred_fallthru
          _
      $region12: #{upconv_forward.1} parent=5 // pred_fallthru
        _
      %p99 = scmp.lt.s32.totalorder %s8, 2
      // Predicated region
      $region17: #{upconv_forward.1} parent=5 // pred_check
        %p100 = pneg %p99
      $region18: #{upconv_forward.1} parent=5 // pred_check_branch
        %102 = sbr.rel (%p100) target = $region20
      $region19: #{upconv_forward.1} parent=5 // pred_region
        // Predicated region
        $region21: #{upconv_forward.1} parent=19 // pred_check
          %p103 = pneg %p49
        $region22: #{upconv_forward.1} parent=19 // pred_check_branch
          %105 = sbr.rel (%p103) target = $region24
        $region23: #{upconv_forward.1} parent=19 // pred_region
          %s106 = sand.u32 %s39, 1
          %s107 = sand.u32 %s39, 1
          %s108 = smul.addr %s107, 80
          %s109 = scalar_lea.vmem [#allocation2], %s108
          %s110 = smul.u32 2, %s8
          %s111 = smul.addr %s110, 8
          %s112 = scalar_lea.vmem %s1, %s111
          // Predicated region
          $region25: #{upconv_forward.1} parent=23 // pred_check
            _
          $region26: #{upconv_forward.1} parent=23 // pred_check_branch
            %114 = sbr.rel (0) target = $region28
          $region27: #{upconv_forward.1} parent=23 // pred_region
            // Predicated region
            $region29: #{upconv_forward.1} parent=27 // pred_check
              _
            $region30: #{upconv_forward.1} parent=27 // pred_check_branch
              %116 = sbr.rel (0) target = $region32
            $region31: #{upconv_forward.1} parent=27 // pred_region
              loop: start=0, step=1, limit=1
              $region33: #{upconv_forward.1} parent=31 // loop_pre_header
                _
              $region34: #{upconv_forward.1} parent=31 // loop_header
                %s118 = sphi 0, %s122
                %p119 = scmp.ge.s32.totalorder %s118, 1
                %s123 = sphi %s112, %s112
                %s124 = sphi %s109, %s109
              $region35: #{upconv_forward.1} parent=31 // loop_header_branch
                %121 = sbr.rel (%p119) target = $region39
              $region36: #{upconv_forward.1} parent=31 // loop_body
                %v125 = vld [vmem:[%s123] sm:$0xff]
                %126 = vst [vmem:[%s124] sm:$0xff] %v125
                %v127 = vld [vmem:[%s123 + $0x8] sm:$0xff]
                %128 = vst [vmem:[%s124 + $0x8] sm:$0xff] %v127
                %v129 = vld [vmem:[%s123 + $0x20] sm:$0xff]
                %130 = vst [vmem:[%s124 + $0x10] sm:$0xff] %v129
                %v131 = vld [vmem:[%s123 + $0x28] sm:$0xff]
                %132 = vst [vmem:[%s124 + $0x18] sm:$0xff] %v131
                %v133 = vld [vmem:[%s123 + $0x40] sm:$0xff]
                %134 = vst [vmem:[%s124 + $0x20] sm:$0xff] %v133
                %v135 = vld [vmem:[%s123 + $0x48] sm:$0xff]
                %136 = vst [vmem:[%s124 + $0x28] sm:$0xff] %v135
                %v137 = vld [vmem:[%s123 + $0x60] sm:$0xff]
                %138 = vst [vmem:[%s124 + $0x30] sm:$0xff] %v137
                %v139 = vld [vmem:[%s123 + $0x68] sm:$0xff]
                %140 = vst [vmem:[%s124 + $0x38] sm:$0xff] %v139
                %v141 = vld [vmem:[%s123 + $0x80] sm:$0xff]
                %142 = vst [vmem:[%s124 + $0x40] sm:$0xff] %v141
                %v143 = vld [vmem:[%s123 + $0x88] sm:$0xff]
                %144 = vst [vmem:[%s124 + $0x48] sm:$0xff] %v143
              $region37: #{upconv_forward.1} parent=31 // loop_footer
                %s122 = sadd.s32 1, %s118
              $region38: #{upconv_forward.1} parent=31 // loop_footer_branch
                %117 = sbr.rel target = $region34
              $region39: #{upconv_forward.1} parent=31 // loop_exit
                _
            $region32: #{upconv_forward.1} parent=27 // pred_fallthru
              _
            // Predicated region
            $region40: #{upconv_forward.1} parent=27 // pred_check
              _
            $region41: #{upconv_forward.1} parent=27 // pred_check_branch
              %146 = sbr.rel target = $region43
            $region42: #{upconv_forward.1} parent=27 // pred_region
              _
            $region43: #{upconv_forward.1} parent=27 // pred_fallthru
              _
          $region28: #{upconv_forward.1} parent=23 // pred_fallthru
            _
          %147 = vnop
        $region24: #{upconv_forward.1} parent=19 // pred_fallthru
          _
      $region20: #{upconv_forward.1} parent=5 // pred_fallthru
        _
      %p148 = scmp.le.s32.totalorder 1, %s8
      %p149 = scmp.lt.s32.totalorder %s8, 3
      %p150 = pnand %p148, %p149
      %p151 = pneg %p150
      // Predicated region
      $region44: #{upconv_forward.1} parent=5 // pred_check
        _
      $region45: #{upconv_forward.1} parent=5 // pred_check_branch
        %153 = sbr.rel (%p150) target = $region47
      $region46: #{upconv_forward.1} parent=5 // pred_region
        %s154 = ssub.s32 %s8, 1
        %s155 = sand.u32 %s42, 1
        %s156 = sand.u32 %s42, 1
        %s157 = smul.addr %s156, 80
        %s158 = scalar_lea.vmem [#allocation2], %s157
        // Predicated region
        $region48: #{upconv_forward.1} parent=46 // pred_check
          %p159 = pneg %p55
        $region49: #{upconv_forward.1} parent=46 // pred_check_branch
          %161 = sbr.rel (%p159) target = $region51
        $region50: #{upconv_forward.1} parent=46 // pred_region
          _
        $region51: #{upconv_forward.1} parent=46 // pred_fallthru
          _
        %p162 = pneg %p29
        %p163 = pneg %p26
        %s164 = sand.u32 %s42, 1
        %s165 = sand.u32 %s42, 1
        %s166 = smul.addr %s165, 80
        %s167 = scalar_lea.vmem [#allocation2], %s166
        %p168 = pneg %p55
        %p169 = pneg %p52
        %p170 = pneg %p81
        %p171 = pneg %p78
        %s172 = sand.u32 %s68, 1
        %s173 = sand.u32 %s68, 1
        %s174 = smul.addr %s173, 64
        %s175 = scalar_lea.vmem [#allocation3], %s174
        %s176 = smul.u32 2, %s13
        %s177 = smul.u32 2, %s13
        %v178 = vld [vmem:[%s0] sm:$0xff]
        %v179 = vld [vmem:[%s0 + $0x8] sm:$0xff]
        %v180 = vld [vmem:[%s0 + $0x10] sm:$0xff]
        %v181 = vld [vmem:[%s0 + $0x18] sm:$0xff]
        %v182 = vld [vmem:[%s158] sm:$0xff]
        %v183 = vld [vmem:[%s158 + $0x8] sm:$0xff]
        %v184 = vld [vmem:[%s158 + $0x10] sm:$0xff]
        %v185 = vld [vmem:[%s158 + $0x18] sm:$0xff]
        %v186 = vld [vmem:[%s158 + $0x20] sm:$0xff]
        %v187 = vld [vmem:[%s158 + $0x28] sm:$0xff]
        %v188 = vld [vmem:[%s158 + $0x30] sm:$0xff]
        %v189 = vld [vmem:[%s158 + $0x38] sm:$0xff]
        %v190 = vld [vmem:[%s158 + $0x40] sm:$0xf]
        %v191 = vld [vmem:[%s158 + $0x48] sm:$0xf]
        %vm192 = vcmask 293888
        %v194 = vsel %vm192, %v178, 0
        %v197 = vsel %vm192, %v179, 0
        %v200 = vsel %vm192, %v180, 0
        %v203 = vsel %vm192, %v181, 0
        %vm205 = vcmask 1043456
        %v207 = vsel %vm205, %v190, 0
        %v210 = vsel %vm205, %v191, 0
        %212 = vmatpush.msra.mxu0 0.0
        %213 = vmatpush.msra.mxu0 0.0
        %214 = vmatpush.msra.mxu0 0.0
        %215 = vmatpush.msra.mxu0 0.0
        %216 = vmatpush.msra.mxu0 0.0
        %217 = vmatpush.msra.mxu0 0.0
        %218 = vmatpush.msra.mxu0 0.0
        %219 = vmatpush.msra.mxu0 0.0
        %220 = vmatpush.msra.mxu0 0.0
        %221 = vmatpush.msra.mxu0 0.0
        %222 = vmatpush.msra.mxu0 0.0
        %223 = vmatpush.msra.mxu0 %v207
        %224 = vmatpush.msra.mxu0 %v188
        %225 = vmatpush.msra.mxu0 %v186
        %226 = vmatpush.msra.mxu0 %v184
        %227 = vmatpush.msra.mxu0 %v182
        %228 = vmatmul.f32.gmra.mxu0 %v194
        %v229 = vpop.f32.mrf.mxu0
        %v230 = vadd.f32 0.0, %v229
        %231 = vmatmul.f32.gmra.mxu0 %v197
        %v232 = vpop.f32.mrf.mxu0
        %v233 = vadd.f32 0.0, %v232
        %234 = vmatmul.f32.gmra.mxu0 %v200
        %v235 = vpop.f32.mrf.mxu0
        %v236 = vadd.f32 0.0, %v235
        %237 = vmatmul.f32.gmra.mxu0 %v203
        %v238 = vpop.f32.mrf.mxu0
        %v239 = vadd.f32 0.0, %v238
        %240 = vdwg.mxu0
        %241 = vmatpush.msra.mxu0 0.0
        %242 = vmatpush.msra.mxu0 0.0
        %243 = vmatpush.msra.mxu0 0.0
        %244 = vmatpush.msra.mxu0 0.0
        %245 = vmatpush.msra.mxu0 0.0
        %246 = vmatpush.msra.mxu0 0.0
        %247 = vmatpush.msra.mxu0 0.0
        %248 = vmatpush.msra.mxu0 0.0
        %249 = vmatpush.msra.mxu0 0.0
        %250 = vmatpush.msra.mxu0 0.0
        %251 = vmatpush.msra.mxu0 0.0
        %252 = vmatpush.msra.mxu0 %v210
        %253 = vmatpush.msra.mxu0 %v189
        %254 = vmatpush.msra.mxu0 %v187
        %255 = vmatpush.msra.mxu0 %v185
        %256 = vmatpush.msra.mxu0 %v183
        %257 = vmatmul.f32.gmra.mxu0 %v194
        %v258 = vpop.f32.mrf.mxu0
        %v259 = vadd.f32 0.0, %v258
        %260 = vmatmul.f32.gmra.mxu0 %v197
        %v261 = vpop.f32.mrf.mxu0
        %v262 = vadd.f32 0.0, %v261
        %263 = vmatmul.f32.gmra.mxu0 %v200
        %v264 = vpop.f32.mrf.mxu0
        %v265 = vadd.f32 0.0, %v264
        %266 = vmatmul.f32.gmra.mxu0 %v203
        %v267 = vpop.f32.mrf.mxu0
        %v268 = vadd.f32 0.0, %v267
        %269 = vdwg.mxu0
        %v270 = vmul.f32 %v230, 0.2
        %v271 = vmul.f32 %v259, 0.2
        %v272 = vmul.f32 %v233, 0.2
        %v273 = vmul.f32 %v262, 0.2
        %v274 = vmul.f32 %v236, 0.2
        %v275 = vmul.f32 %v265, 0.2
        %v276 = vmul.f32 %v239, 0.2
        %v277 = vmul.f32 %v268, 0.2
        %v278 = vmax.f32 %v230, %v270
        %v279 = vmax.f32 %v259, %v271
        %v280 = vmax.f32 %v233, %v272
        %v281 = vmax.f32 %v262, %v273
        %v282 = vmax.f32 %v236, %v274
        %v283 = vmax.f32 %v265, %v275
        %v284 = vmax.f32 %v239, %v276
        %v285 = vmax.f32 %v268, %v277
        %286 = vst [vmem:[%s175] sm:$0xff] %v278
        %287 = vst [vmem:[%s175 + $0x8] sm:$0xff] %v279
        %288 = vst [vmem:[%s175 + $0x10] sm:$0xff] %v280
        %289 = vst [vmem:[%s175 + $0x18] sm:$0xff] %v281
        %290 = vst [vmem:[%s175 + $0x20] sm:$0xff] %v282
        %291 = vst [vmem:[%s175 + $0x28] sm:$0xff] %v283
        %292 = vst [vmem:[%s175 + $0x30] sm:$0xff] %v284
        %293 = vst [vmem:[%s175 + $0x38] sm:$0xff] %v285
        %s294 = sand.u32 %s68, 1
        %s295 = sand.u32 %s68, 1
        %s296 = smul.addr %s295, 64
        %s297 = scalar_lea.vmem [#allocation3], %s296
        // Predicated region
        $region52: #{upconv_forward.1} parent=46 // pred_check
          %p298 = pneg %p78
        $region53: #{upconv_forward.1} parent=46 // pred_check_branch
          %300 = sbr.rel (%p298) target = $region55
        $region54: #{upconv_forward.1} parent=46 // pred_region
          %s301 = smul.u32 2, %s13
          %s302 = smul.addr %s301, 8
          %s303 = scalar_lea.vmem %s2, %s302
          // Predicated region
          $region56: #{upconv_forward.1} parent=54 // pred_check
            _
          $region57: #{upconv_forward.1} parent=54 // pred_check_branch
            %305 = sbr.rel (0) target = $region59
          $region58: #{upconv_forward.1} parent=54 // pred_region
            // Predicated region
            $region60: #{upconv_forward.1} parent=58 // pred_check
              _
            $region61: #{upconv_forward.1} parent=58 // pred_check_branch
              %307 = sbr.rel (0) target = $region63
            $region62: #{upconv_forward.1} parent=58 // pred_region
              loop: start=0, step=1, limit=1
              $region64: #{upconv_forward.1} parent=62 // loop_pre_header
                _
              $region65: #{upconv_forward.1} parent=62 // loop_header
                %s309 = sphi 0, %s313
                %p310 = scmp.ge.s32.totalorder %s309, 1
                %s314 = sphi %s297, %s297
                %s315 = sphi %s303, %s303
              $region66: #{upconv_forward.1} parent=62 // loop_header_branch
                %312 = sbr.rel (%p310) target = $region70
              $region67: #{upconv_forward.1} parent=62 // loop_body
                %v316 = vld [vmem:[%s314] sm:$0xff]
                %317 = vst [vmem:[%s315] sm:$0xff] %v316
                %v318 = vld [vmem:[%s314 + $0x8] sm:$0xff]
                %319 = vst [vmem:[%s315 + $0x8] sm:$0xff] %v318
                %v320 = vld [vmem:[%s314 + $0x10] sm:$0xff]
                %321 = vst [vmem:[%s315 + $0x20] sm:$0xff] %v320
                %v322 = vld [vmem:[%s314 + $0x18] sm:$0xff]
                %323 = vst [vmem:[%s315 + $0x28] sm:$0xff] %v322
                %v324 = vld [vmem:[%s314 + $0x20] sm:$0xff]
                %325 = vst [vmem:[%s315 + $0x40] sm:$0xff] %v324
                %v326 = vld [vmem:[%s314 + $0x28] sm:$0xff]
                %327 = vst [vmem:[%s315 + $0x48] sm:$0xff] %v326
                %v328 = vld [vmem:[%s314 + $0x30] sm:$0xff]
                %329 = vst [vmem:[%s315 + $0x60] sm:$0xff] %v328
                %v330 = vld [vmem:[%s314 + $0x38] sm:$0xff]
                %331 = vst [vmem:[%s315 + $0x68] sm:$0xff] %v330
              $region68: #{upconv_forward.1} parent=62 // loop_footer
                %s313 = sadd.s32 1, %s309
              $region69: #{upconv_forward.1} parent=62 // loop_footer_branch
                %308 = sbr.rel target = $region65
              $region70: #{upconv_forward.1} parent=62 // loop_exit
                _
            $region63: #{upconv_forward.1} parent=58 // pred_fallthru
              _
            // Predicated region
            $region71: #{upconv_forward.1} parent=58 // pred_check
              _
            $region72: #{upconv_forward.1} parent=58 // pred_check_branch
              %333 = sbr.rel target = $region74
            $region73: #{upconv_forward.1} parent=58 // pred_region
              _
            $region74: #{upconv_forward.1} parent=58 // pred_fallthru
              _
          $region59: #{upconv_forward.1} parent=54 // pred_fallthru
            _
          %334 = vnop
        $region55: #{upconv_forward.1} parent=46 // pred_fallthru
          _
      $region47: #{upconv_forward.1} parent=5 // pred_fallthru
        _
      %p335 = scmp.le.s32.totalorder 2, %s8
      // Predicated region
      $region75: #{upconv_forward.1} parent=5 // pred_check
        %p336 = pneg %p335
      $region76: #{upconv_forward.1} parent=5 // pred_check_branch
        %338 = sbr.rel (%p336) target = $region78
      $region77: #{upconv_forward.1} parent=5 // pred_region
        %s339 = ssub.s32 %s8, 2
        // Predicated region
        $region79: #{upconv_forward.1} parent=77 // pred_check
          %p340 = pneg %p84
        $region80: #{upconv_forward.1} parent=77 // pred_check_branch
          %342 = sbr.rel (%p340) target = $region82
        $region81: #{upconv_forward.1} parent=77 // pred_region
          %s343 = sand.u32 %s69, 1
          %s344 = sand.u32 %s69, 1
          %s345 = smul.addr %s344, 64
          %s346 = scalar_lea.vmem [#allocation3], %s345
        $region82: #{upconv_forward.1} parent=77 // pred_fallthru
          _
      $region78: #{upconv_forward.1} parent=5 // pred_fallthru
        _
    $region6: #{upconv_forward.1} parent=1 // loop_footer
      %s12 = sadd.s32 1, %s8
    $region7: #{upconv_forward.1} parent=1 // loop_footer_branch
      %7 = sbr.rel target = $region3
    $region8: #{upconv_forward.1} parent=1 // loop_exit
      _

</llo_original>
